<compile_context>
chip_gen: v7x
topology: tpu7x:2x2x1
jax: 0.10.0
libtpu: 0.0.40
codegen_flags: <defaults>
</compile_context>

<pallas_src>
import functools
import numpy as np
import jax
import jax.numpy as jnp
from jax.experimental import pallas as pl
from jax.experimental.pallas import tpu as pltpu


def _convT_depth_kernel(w_ref, b_ref, x_ref, o_ref, *, C, D, THW, KD):
    """One (batch element, HW-tile) block per grid step.

    w_ref : SMEM f32[C*C*KD]        flattened ConvTranspose3d weight, index (ci*C + co)*KD + kd
    b_ref : SMEM f32[C]             bias
    x_ref : VMEM f32[1, C, D, THW]      input block (lane-dense: HW tile in lanes)
    o_ref : VMEM f32[1, C, D+KD-1, THW] output block
    """

    def tap(co, kd):
        # y = sum_ci W[ci, co, kd] * x[ci]   (pure VPU scalar-plane FMAs).
        # x planes are read from VMEM inside the loop (not hoisted) so large THW tiles
        # don't exceed the 64-vreg file; no jnp.zeros accumulator init.
        y = w_ref[(0 * C + co) * KD + kd] * x_ref[0, 0, :, :]
        for ci in range(1, C):
            y = y + w_ref[(ci * C + co) * KD + kd] * x_ref[0, ci, :, :]
        return y

    for co in range(C):
        b = b_ref[co]
        # Tap 0 covers output depths [0, D): one direct store with the bias folded in.
        o_ref[0, co, 0:D, :] = tap(co, 0) + b
        written = D
        for kd in range(1, KD):
            y = tap(co, kd)  # covers output depths [kd, kd + D)
            # Fresh rows [written, kd + D): direct store, bias folded in.
            o_ref[0, co, written:kd + D, :] = y[written - kd:D, :] + b
            # Overlap rows [kd, written): accumulate into already-written output rows.
            o_ref[0, co, kd:written, :] = o_ref[0, co, kd:written, :] + y[0:written - kd, :]
            written = kd + D


def _pick_hw_tile(HW, C, D, Dout, target_bytes=4 * 1024 * 1024):
    """Largest multiple-of-128 divisor of HW whose (x + out) f32 block is ~target_bytes."""
    if HW % 128 != 0:
        return HW  # full-extent block along the last dim is always legal
    per_elem = 4 * C * (D + Dout)          # x + out bytes per HW element per batch elem
    max_thw = max(128, target_bytes // per_elem)
    best = 128
    t = 128
    while t <= HW and t <= max_thw:
        if HW % t == 0:
            best = t
        t += 128
    return best


def transposed_conv_upsampling(x, weight, bias, *, kernel_size=(2, 1, 1), stride=1,
                               hw_tile=None):
    """Forward of TransposedConvUpsampling.

    x:      [N, C, D, H, W] float32 (PyTorch NCDHW layout).
    weight: [C, C, kD, kH, kW] float32 (PyTorch ConvTranspose3d layout: in, out, kD, kH, kW).
    bias:   [C] float32.
    Returns [N, C, D + kD - 1, H, W] float32.
    """
    N, C, D, H, W = x.shape
    kD, kH, kW = kernel_size
    assert stride == 1 and kH == 1 and kW == 1, "only kernel_size=(kD,1,1), stride=1 supported"
    assert weight.shape == (C, C, kD, kH, kW)
    assert bias.shape == (C,)

    Dout = D + kD - 1
    HW = H * W
    THW = hw_tile if hw_tile is not None else _pick_hw_tile(HW, C, D, Dout)
    assert HW % THW == 0 and (THW % 128 == 0 or THW == HW)

    # Free reshapes (contiguous): minor dim becomes the large spatial product -> lane-dense.
    x2 = x.reshape(N, C, D, HW).astype(jnp.float32)
    w_flat = weight.reshape(C * C * kD).astype(jnp.float32)   # index (ci*C + co)*kD + kd
    b = bias.astype(jnp.float32)

    # Explicit VMEM budget: double-buffered x + out blocks, floor 16 MiB, cap 48 MiB
    # (keeps the same code valid on v7x's 64 MiB VMEM and above v5e's scoped default).
    x_block_bytes = C * D * THW * 4
    o_block_bytes = C * Dout * THW * 4
    vmem_limit = int(min(48 * 1024 * 1024,
                         max(16 * 1024 * 1024, 4 * (x_block_bytes + o_block_bytes))))

    kernel = functools.partial(_convT_depth_kernel, C=C, D=D, THW=THW, KD=kD)
    out = pl.pallas_call(
        kernel,
        out_shape=jax.ShapeDtypeStruct((N, C, Dout, HW), jnp.float32),
        grid=(N, HW // THW),
        in_specs=[
            pl.BlockSpec(memory_space=pltpu.MemorySpace.SMEM),          # weights (scalars)
            pl.BlockSpec(memory_space=pltpu.MemorySpace.SMEM),          # bias    (scalars)
            pl.BlockSpec((1, C, D, THW), lambda n, h: (n, 0, 0, h)),    # x tile
        ],
        out_specs=pl.BlockSpec((1, C, Dout, THW), lambda n, h: (n, 0, 0, h)),
        compiler_params=pltpu.CompilerParams(
            dimension_semantics=("parallel", "parallel"),
            vmem_limit_bytes=vmem_limit,
        ),
    )(w_flat, b, x2)
    return out.reshape(N, C, Dout, H, W)


# Pure-JAX reference for correctness checking (ConvTranspose3d, stride=1, kernel (kD,1,1)).
def ref_forward(x, weight, bias):
    N, C, D, H, W = x.shape
    kD = weight.shape[2]
    w = weight.reshape(C, C, kD)
    out = jnp.zeros((N, C, D + kD - 1, H, W), jnp.float32)
    out = out + bias[None, :, None, None, None]
    for kd in range(kD):
        t = jnp.einsum('ncdhw,ck->nkdhw', x, w[:, :, kd])
        out = out.at[:, :, kd:kd + D].add(t)
    return out


if __name__ == "__main__":
    key = jax.random.PRNGKey(0)
    k = jax.random.split(key, 3)

    # Small shapes consistent with the module: batch=2, channels=4, D=8, H=W=16.
    N, C, D, H, W = 2, 4, 8, 16, 16
    kernel_size = (2, 1, 1)   # module default
    stride = 1                # module default

    x = jax.random.normal(k[0], (N, C, D, H, W), jnp.float32)
    weight = 0.2 * jax.random.normal(k[1], (C, C) + kernel_size, jnp.float32)
    bias = 0.1 * jax.random.normal(k[2], (C,), jnp.float32)

    ref = ref_forward(x, weight, bias)

    # Default path: tile size auto-picked (single HW tile at these toy shapes).
    out = transposed_conv_upsampling(x, weight, bias, kernel_size=kernel_size, stride=stride)
    out = jax.block_until_ready(out)
    np.testing.assert_allclose(np.asarray(out), np.asarray(ref), rtol=1e-4, atol=1e-5)

    # Also exercise the HW-tiled path (grid = (N, HW // 128)) for correctness.
    out_tiled = transposed_conv_upsampling(x, weight, bias, kernel_size=kernel_size,
                                           stride=stride, hw_tile=128)
    out_tiled = jax.block_until_ready(out_tiled)
    np.testing.assert_allclose(np.asarray(out_tiled), np.asarray(ref), rtol=1e-4, atol=1e-5)

    assert out.shape == (N, C, D + kernel_size[0] - 1, H, W)
    print("KERNEL_OK")
</pallas_src>

<mosaic_0001>
module attributes {stable_mosaic.version = 11 : i64} {
  func.func @_convT_depth_kernel(%arg0: i32, %arg1: i32, %arg2: memref<32xf32, #tpu.memory_space<smem>>, %arg3: memref<4xf32, #tpu.memory_space<smem>>, %arg4: memref<1x4x8x256xf32, #tpu.memory_space<vmem>>, %arg5: memref<1x4x9x256xf32, #tpu.memory_space<vmem>>) attributes {dimension_semantics = [#tpu.dimension_semantics<parallel>, #tpu.dimension_semantics<parallel>], iteration_bounds = array<i64: 2, 1>, scalar_prefetch = 0 : i64, scratch_operands = 0 : i64, tpu.core_type = #tpu.core_type<tc>, window_params = [{transform_indices = @transform_0, window_bounds = array<i64: 32>}, {transform_indices = @transform_1, window_bounds = array<i64: 4>}, {transform_indices = @transform_2, window_bounds = array<i64: 1, 4, 8, 256>}, {transform_indices = @transform_3, window_bounds = array<i64: 1, 4, 9, 256>}]} {
    %c0 = arith.constant 0 : index
    %0 = memref.load %arg3[%c0] : memref<4xf32, #tpu.memory_space<smem>>
    %c0_0 = arith.constant 0 : index
    %1 = memref.load %arg2[%c0_0] : memref<32xf32, #tpu.memory_space<smem>>
    %c0_1 = arith.constant 0 : index
    %c0_2 = arith.constant 0 : index
    %c0_3 = arith.constant 0 : index
    %c0_4 = arith.constant 0 : index
    %2 = vector.load %arg4[%c0_1, %c0_2, %c0_3, %c0_4] : memref<1x4x8x256xf32, #tpu.memory_space<vmem>>, vector<1x1x8x256xf32>
    %3 = vector.shape_cast %2 : vector<1x1x8x256xf32> to vector<8x256xf32>
    %4 = vector.broadcast %1 : f32 to vector<8x256xf32>
    %5 = arith.mulf %4, %3 : vector<8x256xf32>
    %c8 = arith.constant 8 : index
    %6 = memref.load %arg2[%c8] : memref<32xf32, #tpu.memory_space<smem>>
    %c0_5 = arith.constant 0 : index
    %c1 = arith.constant 1 : index
    %c0_6 = arith.constant 0 : index
    %c0_7 = arith.constant 0 : index
    %7 = vector.load %arg4[%c0_5, %c1, %c0_6, %c0_7] : memref<1x4x8x256xf32, #tpu.memory_space<vmem>>, vector<1x1x8x256xf32>
    %8 = vector.shape_cast %7 : vector<1x1x8x256xf32> to vector<8x256xf32>
    %9 = vector.broadcast %6 : f32 to vector<8x256xf32>
    %10 = arith.mulf %9, %8 : vector<8x256xf32>
    %11 = arith.addf %5, %10 : vector<8x256xf32>
    %c16 = arith.constant 16 : index
    %12 = memref.load %arg2[%c16] : memref<32xf32, #tpu.memory_space<smem>>
    %c0_8 = arith.constant 0 : index
    %c2 = arith.constant 2 : index
    %c0_9 = arith.constant 0 : index
    %c0_10 = arith.constant 0 : index
    %13 = vector.load %arg4[%c0_8, %c2, %c0_9, %c0_10] : memref<1x4x8x256xf32, #tpu.memory_space<vmem>>, vector<1x1x8x256xf32>
    %14 = vector.shape_cast %13 : vector<1x1x8x256xf32> to vector<8x256xf32>
    %15 = vector.broadcast %12 : f32 to vector<8x256xf32>
    %16 = arith.mulf %15, %14 : vector<8x256xf32>
    %17 = arith.addf %11, %16 : vector<8x256xf32>
    %c24 = arith.constant 24 : index
    %18 = memref.load %arg2[%c24] : memref<32xf32, #tpu.memory_space<smem>>
    %c0_11 = arith.constant 0 : index
    %c3 = arith.constant 3 : index
    %c0_12 = arith.constant 0 : index
    %c0_13 = arith.constant 0 : index
    %19 = vector.load %arg4[%c0_11, %c3, %c0_12, %c0_13] : memref<1x4x8x256xf32, #tpu.memory_space<vmem>>, vector<1x1x8x256xf32>
    %20 = vector.shape_cast %19 : vector<1x1x8x256xf32> to vector<8x256xf32>
    %21 = vector.broadcast %18 : f32 to vector<8x256xf32>
    %22 = arith.mulf %21, %20 : vector<8x256xf32>
    %23 = arith.addf %17, %22 : vector<8x256xf32>
    %24 = vector.broadcast %0 : f32 to vector<8x256xf32>
    %25 = arith.addf %23, %24 : vector<8x256xf32>
    %c0_14 = arith.constant 0 : index
    %c0_15 = arith.constant 0 : index
    %c0_16 = arith.constant 0 : index
    %c0_17 = arith.constant 0 : index
    %26 = vector.load %arg5[%c0_14, %c0_15, %c0_16, %c0_17] : memref<1x4x9x256xf32, #tpu.memory_space<vmem>>, vector<1x1x8x256xf32>
    %27 = vector.shape_cast %26 : vector<1x1x8x256xf32> to vector<8x256xf32>
    %28 = vector.shape_cast %25 : vector<8x256xf32> to vector<1x1x8x256xf32>
    tpu.vector_store %arg5[%c0_14, %c0_15, %c0_16, %c0_17], %28 {strides = array<i32>} : memref<1x4x9x256xf32, #tpu.memory_space<vmem>>, vector<1x1x8x256xf32>,
    %c1_18 = arith.constant 1 : index
    %29 = memref.load %arg2[%c1_18] : memref<32xf32, #tpu.memory_space<smem>>
    %c0_19 = arith.constant 0 : index
    %c0_20 = arith.constant 0 : index
    %c0_21 = arith.constant 0 : index
    %c0_22 = arith.constant 0 : index
    %30 = vector.load %arg4[%c0_19, %c0_20, %c0_21, %c0_22] : memref<1x4x8x256xf32, #tpu.memory_space<vmem>>, vector<1x1x8x256xf32>
    %31 = vector.shape_cast %30 : vector<1x1x8x256xf32> to vector<8x256xf32>
    %32 = vector.broadcast %29 : f32 to vector<8x256xf32>
    %33 = arith.mulf %32, %31 : vector<8x256xf32>
    %c9 = arith.constant 9 : index
    %34 = memref.load %arg2[%c9] : memref<32xf32, #tpu.memory_space<smem>>
    %c0_23 = arith.constant 0 : index
    %c1_24 = arith.constant 1 : index
    %c0_25 = arith.constant 0 : index
    %c0_26 = arith.constant 0 : index
    %35 = vector.load %arg4[%c0_23, %c1_24, %c0_25, %c0_26] : memref<1x4x8x256xf32, #tpu.memory_space<vmem>>, vector<1x1x8x256xf32>
    %36 = vector.shape_cast %35 : vector<1x1x8x256xf32> to vector<8x256xf32>
    %37 = vector.broadcast %34 : f32 to vector<8x256xf32>
    %38 = arith.mulf %37, %36 : vector<8x256xf32>
    %39 = arith.addf %33, %38 : vector<8x256xf32>
    %c17 = arith.constant 17 : index
    %40 = memref.load %arg2[%c17] : memref<32xf32, #tpu.memory_space<smem>>
    %c0_27 = arith.constant 0 : index
    %c2_28 = arith.constant 2 : index
    %c0_29 = arith.constant 0 : index
    %c0_30 = arith.constant 0 : index
    %41 = vector.load %arg4[%c0_27, %c2_28, %c0_29, %c0_30] : memref<1x4x8x256xf32, #tpu.memory_space<vmem>>, vector<1x1x8x256xf32>
    %42 = vector.shape_cast %41 : vector<1x1x8x256xf32> to vector<8x256xf32>
    %43 = vector.broadcast %40 : f32 to vector<8x256xf32>
    %44 = arith.mulf %43, %42 : vector<8x256xf32>
    %45 = arith.addf %39, %44 : vector<8x256xf32>
    %c25 = arith.constant 25 : index
    %46 = memref.load %arg2[%c25] : memref<32xf32, #tpu.memory_space<smem>>
    %c0_31 = arith.constant 0 : index
    %c3_32 = arith.constant 3 : index
    %c0_33 = arith.constant 0 : index
    %c0_34 = arith.constant 0 : index
    %47 = vector.load %arg4[%c0_31, %c3_32, %c0_33, %c0_34] : memref<1x4x8x256xf32, #tpu.memory_space<vmem>>, vector<1x1x8x256xf32>
    %48 = vector.shape_cast %47 : vector<1x1x8x256xf32> to vector<8x256xf32>
    %49 = vector.broadcast %46 : f32 to vector<8x256xf32>
    %50 = arith.mulf %49, %48 : vector<8x256xf32>
    %51 = arith.addf %45, %50 : vector<8x256xf32>
    %52 = vector.extract_strided_slice %51 {offsets = [7, 0], sizes = [1, 256], strides = [1, 1]} : vector<8x256xf32> to vector<1x256xf32>
    %53 = vector.broadcast %0 : f32 to vector<1x256xf32>
    %54 = arith.addf %52, %53 : vector<1x256xf32>
    %c0_35 = arith.constant 0 : index
    %c0_36 = arith.constant 0 : index
    %c8_37 = arith.constant 8 : index
    %c0_38 = arith.constant 0 : index
    %55 = vector.load %arg5[%c0_35, %c0_36, %c8_37, %c0_38] : memref<1x4x9x256xf32, #tpu.memory_space<vmem>>, vector<1x1x1x256xf32>
    %56 = vector.shape_cast %55 : vector<1x1x1x256xf32> to vector<1x256xf32>
    %57 = vector.shape_cast %54 : vector<1x256xf32> to vector<1x1x1x256xf32>
    tpu.vector_store %arg5[%c0_35, %c0_36, %c8_37, %c0_38], %57 {strides = array<i32>} : memref<1x4x9x256xf32, #tpu.memory_space<vmem>>, vector<1x1x1x256xf32>,
    %c0_39 = arith.constant 0 : index
    %c0_40 = arith.constant 0 : index
    %c1_41 = arith.constant 1 : index
    %c0_42 = arith.constant 0 : index
    %58 = vector.load %arg5[%c0_39, %c0_40, %c1_41, %c0_42] : memref<1x4x9x256xf32, #tpu.memory_space<vmem>>, vector<1x1x7x256xf32>
    %59 = vector.shape_cast %58 : vector<1x1x7x256xf32> to vector<7x256xf32>
    %60 = vector.extract_strided_slice %51 {offsets = [0, 0], sizes = [7, 256], strides = [1, 1]} : vector<8x256xf32> to vector<7x256xf32>
    %61 = arith.addf %59, %60 : vector<7x256xf32>
    %c0_43 = arith.constant 0 : index
    %c0_44 = arith.constant 0 : index
    %c1_45 = arith.constant 1 : index
    %c0_46 = arith.constant 0 : index
    %62 = vector.load %arg5[%c0_43, %c0_44, %c1_45, %c0_46] : memref<1x4x9x256xf32, #tpu.memory_space<vmem>>, vector<1x1x7x256xf32>
    %63 = vector.shape_cast %62 : vector<1x1x7x256xf32> to vector<7x256xf32>
    %64 = vector.shape_cast %61 : vector<7x256xf32> to vector<1x1x7x256xf32>
    tpu.vector_store %arg5[%c0_43, %c0_44, %c1_45, %c0_46], %64 {strides = array<i32>} : memref<1x4x9x256xf32, #tpu.memory_space<vmem>>, vector<1x1x7x256xf32>,
    %c1_47 = arith.constant 1 : index
    %65 = memref.load %arg3[%c1_47] : memref<4xf32, #tpu.memory_space<smem>>
    %c2_48 = arith.constant 2 : index
    %66 = memref.load %arg2[%c2_48] : memref<32xf32, #tpu.memory_space<smem>>
    %c0_49 = arith.constant 0 : index
    %c0_50 = arith.constant 0 : index
    %c0_51 = arith.constant 0 : index
    %c0_52 = arith.constant 0 : index
    %67 = vector.load %arg4[%c0_49, %c0_50, %c0_51, %c0_52] : memref<1x4x8x256xf32, #tpu.memory_space<vmem>>, vector<1x1x8x256xf32>
    %68 = vector.shape_cast %67 : vector<1x1x8x256xf32> to vector<8x256xf32>
    %69 = vector.broadcast %66 : f32 to vector<8x256xf32>
    %70 = arith.mulf %69, %68 : vector<8x256xf32>
    %c10 = arith.constant 10 : index
    %71 = memref.load %arg2[%c10] : memref<32xf32, #tpu.memory_space<smem>>
    %c0_53 = arith.constant 0 : index
    %c1_54 = arith.constant 1 : index
    %c0_55 = arith.constant 0 : index
    %c0_56 = arith.constant 0 : index
    %72 = vector.load %arg4[%c0_53, %c1_54, %c0_55, %c0_56] : memref<1x4x8x256xf32, #tpu.memory_space<vmem>>, vector<1x1x8x256xf32>
    %73 = vector.shape_cast %72 : vector<1x1x8x256xf32> to vector<8x256xf32>
    %74 = vector.broadcast %71 : f32 to vector<8x256xf32>
    %75 = arith.mulf %74, %73 : vector<8x256xf32>
    %76 = arith.addf %70, %75 : vector<8x256xf32>
    %c18 = arith.constant 18 : index
    %77 = memref.load %arg2[%c18] : memref<32xf32, #tpu.memory_space<smem>>
    %c0_57 = arith.constant 0 : index
    %c2_58 = arith.constant 2 : index
    %c0_59 = arith.constant 0 : index
    %c0_60 = arith.constant 0 : index
    %78 = vector.load %arg4[%c0_57, %c2_58, %c0_59, %c0_60] : memref<1x4x8x256xf32, #tpu.memory_space<vmem>>, vector<1x1x8x256xf32>
    %79 = vector.shape_cast %78 : vector<1x1x8x256xf32> to vector<8x256xf32>
    %80 = vector.broadcast %77 : f32 to vector<8x256xf32>
    %81 = arith.mulf %80, %79 : vector<8x256xf32>
    %82 = arith.addf %76, %81 : vector<8x256xf32>
    %c26 = arith.constant 26 : index
    %83 = memref.load %arg2[%c26] : memref<32xf32, #tpu.memory_space<smem>>
    %c0_61 = arith.constant 0 : index
    %c3_62 = arith.constant 3 : index
    %c0_63 = arith.constant 0 : index
    %c0_64 = arith.constant 0 : index
    %84 = vector.load %arg4[%c0_61, %c3_62, %c0_63, %c0_64] : memref<1x4x8x256xf32, #tpu.memory_space<vmem>>, vector<1x1x8x256xf32>
    %85 = vector.shape_cast %84 : vector<1x1x8x256xf32> to vector<8x256xf32>
    %86 = vector.broadcast %83 : f32 to vector<8x256xf32>
    %87 = arith.mulf %86, %85 : vector<8x256xf32>
    %88 = arith.addf %82, %87 : vector<8x256xf32>
    %89 = vector.broadcast %65 : f32 to vector<8x256xf32>
    %90 = arith.addf %88, %89 : vector<8x256xf32>
    %c0_65 = arith.constant 0 : index
    %c1_66 = arith.constant 1 : index
    %c0_67 = arith.constant 0 : index
    %c0_68 = arith.constant 0 : index
    %91 = vector.load %arg5[%c0_65, %c1_66, %c0_67, %c0_68] : memref<1x4x9x256xf32, #tpu.memory_space<vmem>>, vector<1x1x8x256xf32>
    %92 = vector.shape_cast %91 : vector<1x1x8x256xf32> to vector<8x256xf32>
    %93 = vector.shape_cast %90 : vector<8x256xf32> to vector<1x1x8x256xf32>
    tpu.vector_store %arg5[%c0_65, %c1_66, %c0_67, %c0_68], %93 {strides = array<i32>} : memref<1x4x9x256xf32, #tpu.memory_space<vmem>>, vector<1x1x8x256xf32>,
    %c3_69 = arith.constant 3 : index
    %94 = memref.load %arg2[%c3_69] : memref<32xf32, #tpu.memory_space<smem>>
    %c0_70 = arith.constant 0 : index
    %c0_71 = arith.constant 0 : index
    %c0_72 = arith.constant 0 : index
    %c0_73 = arith.constant 0 : index
    %95 = vector.load %arg4[%c0_70, %c0_71, %c0_72, %c0_73] : memref<1x4x8x256xf32, #tpu.memory_space<vmem>>, vector<1x1x8x256xf32>
    %96 = vector.shape_cast %95 : vector<1x1x8x256xf32> to vector<8x256xf32>
    %97 = vector.broadcast %94 : f32 to vector<8x256xf32>
    %98 = arith.mulf %97, %96 : vector<8x256xf32>
    %c11 = arith.constant 11 : index
    %99 = memref.load %arg2[%c11] : memref<32xf32, #tpu.memory_space<smem>>
    %c0_74 = arith.constant 0 : index
    %c1_75 = arith.constant 1 : index
    %c0_76 = arith.constant 0 : index
    %c0_77 = arith.constant 0 : index
    %100 = vector.load %arg4[%c0_74, %c1_75, %c0_76, %c0_77] : memref<1x4x8x256xf32, #tpu.memory_space<vmem>>, vector<1x1x8x256xf32>
    %101 = vector.shape_cast %100 : vector<1x1x8x256xf32> to vector<8x256xf32>
    %102 = vector.broadcast %99 : f32 to vector<8x256xf32>
    %103 = arith.mulf %102, %101 : vector<8x256xf32>
    %104 = arith.addf %98, %103 : vector<8x256xf32>
    %c19 = arith.constant 19 : index
    %105 = memref.load %arg2[%c19] : memref<32xf32, #tpu.memory_space<smem>>
    %c0_78 = arith.constant 0 : index
    %c2_79 = arith.constant 2 : index
    %c0_80 = arith.constant 0 : index
    %c0_81 = arith.constant 0 : index
    %106 = vector.load %arg4[%c0_78, %c2_79, %c0_80, %c0_81] : memref<1x4x8x256xf32, #tpu.memory_space<vmem>>, vector<1x1x8x256xf32>
    %107 = vector.shape_cast %106 : vector<1x1x8x256xf32> to vector<8x256xf32>
    %108 = vector.broadcast %105 : f32 to vector<8x256xf32>
    %109 = arith.mulf %108, %107 : vector<8x256xf32>
    %110 = arith.addf %104, %109 : vector<8x256xf32>
    %c27 = arith.constant 27 : index
    %111 = memref.load %arg2[%c27] : memref<32xf32, #tpu.memory_space<smem>>
    %c0_82 = arith.constant 0 : index
    %c3_83 = arith.constant 3 : index
    %c0_84 = arith.constant 0 : index
    %c0_85 = arith.constant 0 : index
    %112 = vector.load %arg4[%c0_82, %c3_83, %c0_84, %c0_85] : memref<1x4x8x256xf32, #tpu.memory_space<vmem>>, vector<1x1x8x256xf32>
    %113 = vector.shape_cast %112 : vector<1x1x8x256xf32> to vector<8x256xf32>
    %114 = vector.broadcast %111 : f32 to vector<8x256xf32>
    %115 = arith.mulf %114, %113 : vector<8x256xf32>
    %116 = arith.addf %110, %115 : vector<8x256xf32>
    %117 = vector.extract_strided_slice %116 {offsets = [7, 0], sizes = [1, 256], strides = [1, 1]} : vector<8x256xf32> to vector<1x256xf32>
    %118 = vector.broadcast %65 : f32 to vector<1x256xf32>
    %119 = arith.addf %117, %118 : vector<1x256xf32>
    %c0_86 = arith.constant 0 : index
    %c1_87 = arith.constant 1 : index
    %c8_88 = arith.constant 8 : index
    %c0_89 = arith.constant 0 : index
    %120 = vector.load %arg5[%c0_86, %c1_87, %c8_88, %c0_89] : memref<1x4x9x256xf32, #tpu.memory_space<vmem>>, vector<1x1x1x256xf32>
    %121 = vector.shape_cast %120 : vector<1x1x1x256xf32> to vector<1x256xf32>
    %122 = vector.shape_cast %119 : vector<1x256xf32> to vector<1x1x1x256xf32>
    tpu.vector_store %arg5[%c0_86, %c1_87, %c8_88, %c0_89], %122 {strides = array<i32>} : memref<1x4x9x256xf32, #tpu.memory_space<vmem>>, vector<1x1x1x256xf32>,
    %c0_90 = arith.constant 0 : index
    %c1_91 = arith.constant 1 : index
    %c1_92 = arith.constant 1 : index
    %c0_93 = arith.constant 0 : index
    %123 = vector.load %arg5[%c0_90, %c1_91, %c1_92, %c0_93] : memref<1x4x9x256xf32, #tpu.memory_space<vmem>>, vector<1x1x7x256xf32>
    %124 = vector.shape_cast %123 : vector<1x1x7x256xf32> to vector<7x256xf32>
    %125 = vector.extract_strided_slice %116 {offsets = [0, 0], sizes = [7, 256], strides = [1, 1]} : vector<8x256xf32> to vector<7x256xf32>
    %126 = arith.addf %124, %125 : vector<7x256xf32>
    %c0_94 = arith.constant 0 : index
    %c1_95 = arith.constant 1 : index
    %c1_96 = arith.constant 1 : index
    %c0_97 = arith.constant 0 : index
    %127 = vector.load %arg5[%c0_94, %c1_95, %c1_96, %c0_97] : memref<1x4x9x256xf32, #tpu.memory_space<vmem>>, vector<1x1x7x256xf32>
    %128 = vector.shape_cast %127 : vector<1x1x7x256xf32> to vector<7x256xf32>
    %129 = vector.shape_cast %126 : vector<7x256xf32> to vector<1x1x7x256xf32>
    tpu.vector_store %arg5[%c0_94, %c1_95, %c1_96, %c0_97], %129 {strides = array<i32>} : memref<1x4x9x256xf32, #tpu.memory_space<vmem>>, vector<1x1x7x256xf32>,
    %c2_98 = arith.constant 2 : index
    %130 = memref.load %arg3[%c2_98] : memref<4xf32, #tpu.memory_space<smem>>
    %c4 = arith.constant 4 : index
    %131 = memref.load %arg2[%c4] : memref<32xf32, #tpu.memory_space<smem>>
    %c0_99 = arith.constant 0 : index
    %c0_100 = arith.constant 0 : index
    %c0_101 = arith.constant 0 : index
    %c0_102 = arith.constant 0 : index
    %132 = vector.load %arg4[%c0_99, %c0_100, %c0_101, %c0_102] : memref<1x4x8x256xf32, #tpu.memory_space<vmem>>, vector<1x1x8x256xf32>
    %133 = vector.shape_cast %132 : vector<1x1x8x256xf32> to vector<8x256xf32>
    %134 = vector.broadcast %131 : f32 to vector<8x256xf32>
    %135 = arith.mulf %134, %133 : vector<8x256xf32>
    %c12 = arith.constant 12 : index
    %136 = memref.load %arg2[%c12] : memref<32xf32, #tpu.memory_space<smem>>
    %c0_103 = arith.constant 0 : index
    %c1_104 = arith.constant 1 : index
    %c0_105 = arith.constant 0 : index
    %c0_106 = arith.constant 0 : index
    %137 = vector.load %arg4[%c0_103, %c1_104, %c0_105, %c0_106] : memref<1x4x8x256xf32, #tpu.memory_space<vmem>>, vector<1x1x8x256xf32>
    %138 = vector.shape_cast %137 : vector<1x1x8x256xf32> to vector<8x256xf32>
    %139 = vector.broadcast %136 : f32 to vector<8x256xf32>
    %140 = arith.mulf %139, %138 : vector<8x256xf32>
    %141 = arith.addf %135, %140 : vector<8x256xf32>
    %c20 = arith.constant 20 : index
    %142 = memref.load %arg2[%c20] : memref<32xf32, #tpu.memory_space<smem>>
    %c0_107 = arith.constant 0 : index
    %c2_108 = arith.constant 2 : index
    %c0_109 = arith.constant 0 : index
    %c0_110 = arith.constant 0 : index
    %143 = vector.load %arg4[%c0_107, %c2_108, %c0_109, %c0_110] : memref<1x4x8x256xf32, #tpu.memory_space<vmem>>, vector<1x1x8x256xf32>
    %144 = vector.shape_cast %143 : vector<1x1x8x256xf32> to vector<8x256xf32>
    %145 = vector.broadcast %142 : f32 to vector<8x256xf32>
    %146 = arith.mulf %145, %144 : vector<8x256xf32>
    %147 = arith.addf %141, %146 : vector<8x256xf32>
    %c28 = arith.constant 28 : index
    %148 = memref.load %arg2[%c28] : memref<32xf32, #tpu.memory_space<smem>>
    %c0_111 = arith.constant 0 : index
    %c3_112 = arith.constant 3 : index
    %c0_113 = arith.constant 0 : index
    %c0_114 = arith.constant 0 : index
    %149 = vector.load %arg4[%c0_111, %c3_112, %c0_113, %c0_114] : memref<1x4x8x256xf32, #tpu.memory_space<vmem>>, vector<1x1x8x256xf32>
    %150 = vector.shape_cast %149 : vector<1x1x8x256xf32> to vector<8x256xf32>
    %151 = vector.broadcast %148 : f32 to vector<8x256xf32>
    %152 = arith.mulf %151, %150 : vector<8x256xf32>
    %153 = arith.addf %147, %152 : vector<8x256xf32>
    %154 = vector.broadcast %130 : f32 to vector<8x256xf32>
    %155 = arith.addf %153, %154 : vector<8x256xf32>
    %c0_115 = arith.constant 0 : index
    %c2_116 = arith.constant 2 : index
    %c0_117 = arith.constant 0 : index
    %c0_118 = arith.constant 0 : index
    %156 = vector.load %arg5[%c0_115, %c2_116, %c0_117, %c0_118] : memref<1x4x9x256xf32, #tpu.memory_space<vmem>>, vector<1x1x8x256xf32>
    %157 = vector.shape_cast %156 : vector<1x1x8x256xf32> to vector<8x256xf32>
    %158 = vector.shape_cast %155 : vector<8x256xf32> to vector<1x1x8x256xf32>
    tpu.vector_store %arg5[%c0_115, %c2_116, %c0_117, %c0_118], %158 {strides = array<i32>} : memref<1x4x9x256xf32, #tpu.memory_space<vmem>>, vector<1x1x8x256xf32>,
    %c5 = arith.constant 5 : index
    %159 = memref.load %arg2[%c5] : memref<32xf32, #tpu.memory_space<smem>>
    %c0_119 = arith.constant 0 : index
    %c0_120 = arith.constant 0 : index
    %c0_121 = arith.constant 0 : index
    %c0_122 = arith.constant 0 : index
    %160 = vector.load %arg4[%c0_119, %c0_120, %c0_121, %c0_122] : memref<1x4x8x256xf32, #tpu.memory_space<vmem>>, vector<1x1x8x256xf32>
    %161 = vector.shape_cast %160 : vector<1x1x8x256xf32> to vector<8x256xf32>
    %162 = vector.broadcast %159 : f32 to vector<8x256xf32>
    %163 = arith.mulf %162, %161 : vector<8x256xf32>
    %c13 = arith.constant 13 : index
    %164 = memref.load %arg2[%c13] : memref<32xf32, #tpu.memory_space<smem>>
    %c0_123 = arith.constant 0 : index
    %c1_124 = arith.constant 1 : index
    %c0_125 = arith.constant 0 : index
    %c0_126 = arith.constant 0 : index
    %165 = vector.load %arg4[%c0_123, %c1_124, %c0_125, %c0_126] : memref<1x4x8x256xf32, #tpu.memory_space<vmem>>, vector<1x1x8x256xf32>
    %166 = vector.shape_cast %165 : vector<1x1x8x256xf32> to vector<8x256xf32>
    %167 = vector.broadcast %164 : f32 to vector<8x256xf32>
    %168 = arith.mulf %167, %166 : vector<8x256xf32>
    %169 = arith.addf %163, %168 : vector<8x256xf32>
    %c21 = arith.constant 21 : index
    %170 = memref.load %arg2[%c21] : memref<32xf32, #tpu.memory_space<smem>>
    %c0_127 = arith.constant 0 : index
    %c2_128 = arith.constant 2 : index
    %c0_129 = arith.constant 0 : index
    %c0_130 = arith.constant 0 : index
    %171 = vector.load %arg4[%c0_127, %c2_128, %c0_129, %c0_130] : memref<1x4x8x256xf32, #tpu.memory_space<vmem>>, vector<1x1x8x256xf32>
    %172 = vector.shape_cast %171 : vector<1x1x8x256xf32> to vector<8x256xf32>
    %173 = vector.broadcast %170 : f32 to vector<8x256xf32>
    %174 = arith.mulf %173, %172 : vector<8x256xf32>
    %175 = arith.addf %169, %174 : vector<8x256xf32>
    %c29 = arith.constant 29 : index
    %176 = memref.load %arg2[%c29] : memref<32xf32, #tpu.memory_space<smem>>
    %c0_131 = arith.constant 0 : index
    %c3_132 = arith.constant 3 : index
    %c0_133 = arith.constant 0 : index
    %c0_134 = arith.constant 0 : index
    %177 = vector.load %arg4[%c0_131, %c3_132, %c0_133, %c0_134] : memref<1x4x8x256xf32, #tpu.memory_space<vmem>>, vector<1x1x8x256xf32>
    %178 = vector.shape_cast %177 : vector<1x1x8x256xf32> to vector<8x256xf32>
    %179 = vector.broadcast %176 : f32 to vector<8x256xf32>
    %180 = arith.mulf %179, %178 : vector<8x256xf32>
    %181 = arith.addf %175, %180 : vector<8x256xf32>
    %182 = vector.extract_strided_slice %181 {offsets = [7, 0], sizes = [1, 256], strides = [1, 1]} : vector<8x256xf32> to vector<1x256xf32>
    %183 = vector.broadcast %130 : f32 to vector<1x256xf32>
    %184 = arith.addf %182, %183 : vector<1x256xf32>
    %c0_135 = arith.constant 0 : index
    %c2_136 = arith.constant 2 : index
    %c8_137 = arith.constant 8 : index
    %c0_138 = arith.constant 0 : index
    %185 = vector.load %arg5[%c0_135, %c2_136, %c8_137, %c0_138] : memref<1x4x9x256xf32, #tpu.memory_space<vmem>>, vector<1x1x1x256xf32>
    %186 = vector.shape_cast %185 : vector<1x1x1x256xf32> to vector<1x256xf32>
    %187 = vector.shape_cast %184 : vector<1x256xf32> to vector<1x1x1x256xf32>
    tpu.vector_store %arg5[%c0_135, %c2_136, %c8_137, %c0_138], %187 {strides = array<i32>} : memref<1x4x9x256xf32, #tpu.memory_space<vmem>>, vector<1x1x1x256xf32>,
    %c0_139 = arith.constant 0 : index
    %c2_140 = arith.constant 2 : index
    %c1_141 = arith.constant 1 : index
    %c0_142 = arith.constant 0 : index
    %188 = vector.load %arg5[%c0_139, %c2_140, %c1_141, %c0_142] : memref<1x4x9x256xf32, #tpu.memory_space<vmem>>, vector<1x1x7x256xf32>
    %189 = vector.shape_cast %188 : vector<1x1x7x256xf32> to vector<7x256xf32>
    %190 = vector.extract_strided_slice %181 {offsets = [0, 0], sizes = [7, 256], strides = [1, 1]} : vector<8x256xf32> to vector<7x256xf32>
    %191 = arith.addf %189, %190 : vector<7x256xf32>
    %c0_143 = arith.constant 0 : index
    %c2_144 = arith.constant 2 : index
    %c1_145 = arith.constant 1 : index
    %c0_146 = arith.constant 0 : index
    %192 = vector.load %arg5[%c0_143, %c2_144, %c1_145, %c0_146] : memref<1x4x9x256xf32, #tpu.memory_space<vmem>>, vector<1x1x7x256xf32>
    %193 = vector.shape_cast %192 : vector<1x1x7x256xf32> to vector<7x256xf32>
    %194 = vector.shape_cast %191 : vector<7x256xf32> to vector<1x1x7x256xf32>
    tpu.vector_store %arg5[%c0_143, %c2_144, %c1_145, %c0_146], %194 {strides = array<i32>} : memref<1x4x9x256xf32, #tpu.memory_space<vmem>>, vector<1x1x7x256xf32>,
    %c3_147 = arith.constant 3 : index
    %195 = memref.load %arg3[%c3_147] : memref<4xf32, #tpu.memory_space<smem>>
    %c6 = arith.constant 6 : index
    %196 = memref.load %arg2[%c6] : memref<32xf32, #tpu.memory_space<smem>>
    %c0_148 = arith.constant 0 : index
    %c0_149 = arith.constant 0 : index
    %c0_150 = arith.constant 0 : index
    %c0_151 = arith.constant 0 : index
    %197 = vector.load %arg4[%c0_148, %c0_149, %c0_150, %c0_151] : memref<1x4x8x256xf32, #tpu.memory_space<vmem>>, vector<1x1x8x256xf32>
    %198 = vector.shape_cast %197 : vector<1x1x8x256xf32> to vector<8x256xf32>
    %199 = vector.broadcast %196 : f32 to vector<8x256xf32>
    %200 = arith.mulf %199, %198 : vector<8x256xf32>
    %c14 = arith.constant 14 : index
    %201 = memref.load %arg2[%c14] : memref<32xf32, #tpu.memory_space<smem>>
    %c0_152 = arith.constant 0 : index
    %c1_153 = arith.constant 1 : index
    %c0_154 = arith.constant 0 : index
    %c0_155 = arith.constant 0 : index
    %202 = vector.load %arg4[%c0_152, %c1_153, %c0_154, %c0_155] : memref<1x4x8x256xf32, #tpu.memory_space<vmem>>, vector<1x1x8x256xf32>
    %203 = vector.shape_cast %202 : vector<1x1x8x256xf32> to vector<8x256xf32>
    %204 = vector.broadcast %201 : f32 to vector<8x256xf32>
    %205 = arith.mulf %204, %203 : vector<8x256xf32>
    %206 = arith.addf %200, %205 : vector<8x256xf32>
    %c22 = arith.constant 22 : index
    %207 = memref.load %arg2[%c22] : memref<32xf32, #tpu.memory_space<smem>>
    %c0_156 = arith.constant 0 : index
    %c2_157 = arith.constant 2 : index
    %c0_158 = arith.constant 0 : index
    %c0_159 = arith.constant 0 : index
    %208 = vector.load %arg4[%c0_156, %c2_157, %c0_158, %c0_159] : memref<1x4x8x256xf32, #tpu.memory_space<vmem>>, vector<1x1x8x256xf32>
    %209 = vector.shape_cast %208 : vector<1x1x8x256xf32> to vector<8x256xf32>
    %210 = vector.broadcast %207 : f32 to vector<8x256xf32>
    %211 = arith.mulf %210, %209 : vector<8x256xf32>
    %212 = arith.addf %206, %211 : vector<8x256xf32>
    %c30 = arith.constant 30 : index
    %213 = memref.load %arg2[%c30] : memref<32xf32, #tpu.memory_space<smem>>
    %c0_160 = arith.constant 0 : index
    %c3_161 = arith.constant 3 : index
    %c0_162 = arith.constant 0 : index
    %c0_163 = arith.constant 0 : index
    %214 = vector.load %arg4[%c0_160, %c3_161, %c0_162, %c0_163] : memref<1x4x8x256xf32, #tpu.memory_space<vmem>>, vector<1x1x8x256xf32>
    %215 = vector.shape_cast %214 : vector<1x1x8x256xf32> to vector<8x256xf32>
    %216 = vector.broadcast %213 : f32 to vector<8x256xf32>
    %217 = arith.mulf %216, %215 : vector<8x256xf32>
    %218 = arith.addf %212, %217 : vector<8x256xf32>
    %219 = vector.broadcast %195 : f32 to vector<8x256xf32>
    %220 = arith.addf %218, %219 : vector<8x256xf32>
    %c0_164 = arith.constant 0 : index
    %c3_165 = arith.constant 3 : index
    %c0_166 = arith.constant 0 : index
    %c0_167 = arith.constant 0 : index
    %221 = vector.load %arg5[%c0_164, %c3_165, %c0_166, %c0_167] : memref<1x4x9x256xf32, #tpu.memory_space<vmem>>, vector<1x1x8x256xf32>
    %222 = vector.shape_cast %221 : vector<1x1x8x256xf32> to vector<8x256xf32>
    %223 = vector.shape_cast %220 : vector<8x256xf32> to vector<1x1x8x256xf32>
    tpu.vector_store %arg5[%c0_164, %c3_165, %c0_166, %c0_167], %223 {strides = array<i32>} : memref<1x4x9x256xf32, #tpu.memory_space<vmem>>, vector<1x1x8x256xf32>,
    %c7 = arith.constant 7 : index
    %224 = memref.load %arg2[%c7] : memref<32xf32, #tpu.memory_space<smem>>
    %c0_168 = arith.constant 0 : index
    %c0_169 = arith.constant 0 : index
    %c0_170 = arith.constant 0 : index
    %c0_171 = arith.constant 0 : index
    %225 = vector.load %arg4[%c0_168, %c0_169, %c0_170, %c0_171] : memref<1x4x8x256xf32, #tpu.memory_space<vmem>>, vector<1x1x8x256xf32>
    %226 = vector.shape_cast %225 : vector<1x1x8x256xf32> to vector<8x256xf32>
    %227 = vector.broadcast %224 : f32 to vector<8x256xf32>
    %228 = arith.mulf %227, %226 : vector<8x256xf32>
    %c15 = arith.constant 15 : index
    %229 = memref.load %arg2[%c15] : memref<32xf32, #tpu.memory_space<smem>>
    %c0_172 = arith.constant 0 : index
    %c1_173 = arith.constant 1 : index
    %c0_174 = arith.constant 0 : index
    %c0_175 = arith.constant 0 : index
    %230 = vector.load %arg4[%c0_172, %c1_173, %c0_174, %c0_175] : memref<1x4x8x256xf32, #tpu.memory_space<vmem>>, vector<1x1x8x256xf32>
    %231 = vector.shape_cast %230 : vector<1x1x8x256xf32> to vector<8x256xf32>
    %232 = vector.broadcast %229 : f32 to vector<8x256xf32>
    %233 = arith.mulf %232, %231 : vector<8x256xf32>
    %234 = arith.addf %228, %233 : vector<8x256xf32>
    %c23 = arith.constant 23 : index
    %235 = memref.load %arg2[%c23] : memref<32xf32, #tpu.memory_space<smem>>
    %c0_176 = arith.constant 0 : index
    %c2_177 = arith.constant 2 : index
    %c0_178 = arith.constant 0 : index
    %c0_179 = arith.constant 0 : index
    %236 = vector.load %arg4[%c0_176, %c2_177, %c0_178, %c0_179] : memref<1x4x8x256xf32, #tpu.memory_space<vmem>>, vector<1x1x8x256xf32>
    %237 = vector.shape_cast %236 : vector<1x1x8x256xf32> to vector<8x256xf32>
    %238 = vector.broadcast %235 : f32 to vector<8x256xf32>
    %239 = arith.mulf %238, %237 : vector<8x256xf32>
    %240 = arith.addf %234, %239 : vector<8x256xf32>
    %c31 = arith.constant 31 : index
    %241 = memref.load %arg2[%c31] : memref<32xf32, #tpu.memory_space<smem>>
    %c0_180 = arith.constant 0 : index
    %c3_181 = arith.constant 3 : index
    %c0_182 = arith.constant 0 : index
    %c0_183 = arith.constant 0 : index
    %242 = vector.load %arg4[%c0_180, %c3_181, %c0_182, %c0_183] : memref<1x4x8x256xf32, #tpu.memory_space<vmem>>, vector<1x1x8x256xf32>
    %243 = vector.shape_cast %242 : vector<1x1x8x256xf32> to vector<8x256xf32>
    %244 = vector.broadcast %241 : f32 to vector<8x256xf32>
    %245 = arith.mulf %244, %243 : vector<8x256xf32>
    %246 = arith.addf %240, %245 : vector<8x256xf32>
    %247 = vector.extract_strided_slice %246 {offsets = [7, 0], sizes = [1, 256], strides = [1, 1]} : vector<8x256xf32> to vector<1x256xf32>
    %248 = vector.broadcast %195 : f32 to vector<1x256xf32>
    %249 = arith.addf %247, %248 : vector<1x256xf32>
    %c0_184 = arith.constant 0 : index
    %c3_185 = arith.constant 3 : index
    %c8_186 = arith.constant 8 : index
    %c0_187 = arith.constant 0 : index
    %250 = vector.load %arg5[%c0_184, %c3_185, %c8_186, %c0_187] : memref<1x4x9x256xf32, #tpu.memory_space<vmem>>, vector<1x1x1x256xf32>
    %251 = vector.shape_cast %250 : vector<1x1x1x256xf32> to vector<1x256xf32>
    %252 = vector.shape_cast %249 : vector<1x256xf32> to vector<1x1x1x256xf32>
    tpu.vector_store %arg5[%c0_184, %c3_185, %c8_186, %c0_187], %252 {strides = array<i32>} : memref<1x4x9x256xf32, #tpu.memory_space<vmem>>, vector<1x1x1x256xf32>,
    %c0_188 = arith.constant 0 : index
    %c3_189 = arith.constant 3 : index
    %c1_190 = arith.constant 1 : index
    %c0_191 = arith.constant 0 : index
    %253 = vector.load %arg5[%c0_188, %c3_189, %c1_190, %c0_191] : memref<1x4x9x256xf32, #tpu.memory_space<vmem>>, vector<1x1x7x256xf32>
    %254 = vector.shape_cast %253 : vector<1x1x7x256xf32> to vector<7x256xf32>
    %255 = vector.extract_strided_slice %246 {offsets = [0, 0], sizes = [7, 256], strides = [1, 1]} : vector<8x256xf32> to vector<7x256xf32>
    %256 = arith.addf %254, %255 : vector<7x256xf32>
    %c0_192 = arith.constant 0 : index
    %c3_193 = arith.constant 3 : index
    %c1_194 = arith.constant 1 : index
    %c0_195 = arith.constant 0 : index
    %257 = vector.load %arg5[%c0_192, %c3_193, %c1_194, %c0_195] : memref<1x4x9x256xf32, #tpu.memory_space<vmem>>, vector<1x1x7x256xf32>
    %258 = vector.shape_cast %257 : vector<1x1x7x256xf32> to vector<7x256xf32>
    %259 = vector.shape_cast %256 : vector<7x256xf32> to vector<1x1x7x256xf32>
    tpu.vector_store %arg5[%c0_192, %c3_193, %c1_194, %c0_195], %259 {strides = array<i32>} : memref<1x4x9x256xf32, #tpu.memory_space<vmem>>, vector<1x1x7x256xf32>,
    return
  }
  func.func @transform_0(%arg0: i32, %arg1: i32) -> i32 {
    %c0_i32 = arith.constant 0 : i32
    %c0_i32_0 = arith.constant 0 : i32
    return %c0_i32 : i32
  }
  func.func @transform_1(%arg0: i32, %arg1: i32) -> i32 {
    %c0_i32 = arith.constant 0 : i32
    %c0_i32_0 = arith.constant 0 : i32
    return %c0_i32 : i32
  }
  func.func @transform_2(%arg0: i32, %arg1: i32) -> (i32, i32, i32, i32) {
    %c0_i32 = arith.constant 0 : i32
    %c0_i32_0 = arith.constant 0 : i32
    %c0_i32_1 = arith.constant 0 : i32
    return %arg0, %c0_i32, %c0_i32_0, %arg1 : i32, i32, i32, i32
  }
  func.func @transform_3(%arg0: i32, %arg1: i32) -> (i32, i32, i32, i32) {
    %c0_i32 = arith.constant 0 : i32
    %c0_i32_0 = arith.constant 0 : i32
    %c0_i32_1 = arith.constant 0 : i32
    return %arg0, %c0_i32, %c0_i32_0, %arg1 : i32, i32, i32, i32
  }
}

</mosaic_0001>

<llo_original>
// kernel: tpu_custom_call.1
$region0: #{tpu_custom_call.1}
  #allocation0 [shape = 'u32[]', space=smem, size = 0x4, offset = 0x4, fixed_abs, tag = 'smem constant byte address 0x4 - core index']
  #allocation1 [shape = 'u32[144,128]{1,0:T(1,128)}', space=vmem, size = 0x12000, scoped, tag = 'internal scratch']
  %s0 = inlined_call_operand.hbm [shape: f32[32], index: 0, kind: input, shape index: {}]
  %s1 = inlined_call_operand.vmem [shape: f32[4], index: 1, kind: input, shape index: {}]
  %s2 = inlined_call_operand.hbm [shape: f32[2,4,8,256], index: 2, kind: input, shape index: {}]
  %s3 = inlined_call_operand.vmem [shape: f32[2,4,9,256], index: 3, kind: output, shape index: {}]
  %s4 = sld [smem:[#allocation0]]
  $region57: #{tpu_custom_call.1} parent=0
    _
  %s6 = ssub.s32 1, %s4
  %s7 = scalar_select 0, %s6, %s4
  $region1: #{tpu_custom_call.1} parent=0
    #allocation2 [shape = 'u8[512]{0}', space=smem, size = 0x200, scoped, tag = 'input window, operand 0, single buffered']
    #allocation3 [shape = 's32[2]{0}', space=sflag, size = 0x8, scoped, tag = 'scoped memory for tpu_custom_call.1']
    #allocation4 [shape = 's32[2]{0}', space=sflag, size = 0x8, scoped, tag = 'scoped memory for tpu_custom_call.1']
    #allocation5 [shape = 's32[2]{0}', space=sflag, size = 0x8, scoped, tag = 'scoped memory for tpu_custom_call.1']
    #allocation6 [shape = 'u8[512]{0}', space=smem, size = 0x200, scoped, tag = 'input window, operand 1, single buffered']
    #allocation7 [shape = 'u8[65536]{0}', space=vmem, size = 0x10000, scoped, tag = 'input window, operand 2']
    %8 = vsyncpa [#allocation4], 0
    %9 = vsyncpa [#allocation5], 0
    %10 = vsyncpa [#allocation3], 0
    %s11 = scalar_lea.sflag [#allocation3], 1
    %12 = vsyncpa %s11, 0
    loop: start=0, step=1, limit=4
    $region2: #{tpu_custom_call.1} parent=1 // loop_pre_header
      _
    $region3: #{tpu_custom_call.1} parent=1 // loop_header
      %s14 = sphi 0, %s18
      %p15 = scmp.ge.s32.totalorder %s14, 4
      %s21 = sphi 0, %s33
      %s22 = sphi 0, %s29
      %s23 = sphi 0, %s21
      %s24 = sphi 0, %s22
      %s25 = sphi 0, %s23
      %s26 = sphi 0, %s24
      %s34 = sphi 0, %s34
      %s36 = sphi 0, %s34
      %s37 = sphi 0, %s36
      %s51 = sphi 0, %s37
      %s55 = sphi 0, %s55
      %s57 = sphi 0, %s55
      %s58 = sphi 0, %s57
      %s72 = sphi 0, %s58
      %s80 = sphi 0, %s82
      %s83 = sphi 0, %s80
      %s84 = sphi 0, %s83
      %s100 = sphi 0, %s84
      %s108 = sphi 0, %s110
      %s111 = sphi 0, %s108
      %s112 = sphi 0, %s111
      %s128 = sphi 0, %s112
    $region4: #{tpu_custom_call.1} parent=1 // loop_header_branch
      %17 = sbr.rel (%p15) target = $region8
    $region5: #{tpu_custom_call.1} parent=1 // loop_body
      %s19 = ssub.s32 %s14, 1
      %s20 = ssub.s32 %s14, 2
      %s27 = sadd.s32 1, %s22
      %p28 = scmp.ge.s32.totalorder %s27, 1
      %s29 = scalar_select %p28, 0, %s27
      %s30 = sadd.s32 1, %s21
      %s31 = scalar_select %p28, %s30, %s21
      %p32 = scmp.ge.s32.totalorder %s31, 2
      %s33 = scalar_select %p32, 0, %s31
      %s35 = sadd.s32 %s34, 1
      %p38 = scmp.eq.s32.totalorder %s14, 1
      %p39 = scmp.ne.s32.totalorder %s34, %s36
      %p40 = scmp.eq.s32.totalorder %s14, 0
      %p41 = por %p39, %p40
      %p42 = scmp.ne.s32.totalorder %s34, %s36
      %p43 = scmp.eq.s32.totalorder %s19, 1
      %p44 = por %p42, %p43
      %p45 = scmp.ne.s32.totalorder %s36, %s37
      %p46 = scmp.eq.s32.totalorder %s19, 0
      %p47 = por %p45, %p46
      %p48 = scmp.ne.s32.totalorder %s36, %s37
      %p49 = scmp.eq.s32.totalorder %s20, 1
      %p50 = por %p48, %p49
      %p52 = scmp.ne.s32.totalorder %s37, %s51
      %p53 = scmp.eq.s32.totalorder %s20, 0
      %p54 = por %p52, %p53
      %s56 = sadd.s32 %s55, 1
      %p59 = scmp.eq.s32.totalorder %s14, 1
      %p60 = scmp.ne.s32.totalorder %s55, %s57
      %p61 = scmp.eq.s32.totalorder %s14, 0
      %p62 = por %p60, %p61
      %p63 = scmp.ne.s32.totalorder %s55, %s57
      %p64 = scmp.eq.s32.totalorder %s19, 1
      %p65 = por %p63, %p64
      %p66 = scmp.ne.s32.totalorder %s57, %s58
      %p67 = scmp.eq.s32.totalorder %s19, 0
      %p68 = por %p66, %p67
      %p69 = scmp.ne.s32.totalorder %s57, %s58
      %p70 = scmp.eq.s32.totalorder %s20, 1
      %p71 = por %p69, %p70
      %p73 = scmp.ne.s32.totalorder %s58, %s72
      %p74 = scmp.eq.s32.totalorder %s20, 0
      %p75 = por %p73, %p74
      %s76 = ssub.s32 %s21, %s33
      %s77 = ssub.s32 %s22, %s29
      %s78 = sor.u32 %s76, %s77
      %p79 = scmp.eq.s32.totalorder %s78, 0
      %s81 = sadd.s32 %s80, 1
      %s82 = scalar_select %p79, %s80, %s81
      %p85 = pneg %p79
      %p86 = scmp.eq.s32.totalorder %s14, 1
      %p87 = por %p85, %p86
      %p88 = scmp.ne.s32.totalorder %s80, %s83
      %p89 = scmp.eq.s32.totalorder %s14, 0
      %p90 = por %p88, %p89
      %p91 = scmp.ne.s32.totalorder %s80, %s83
      %p92 = scmp.eq.s32.totalorder %s19, 1
      %p93 = por %p91, %p92
      %p94 = scmp.ne.s32.totalorder %s83, %s84
      %p95 = scmp.eq.s32.totalorder %s19, 0
      %p96 = por %p94, %p95
      %p97 = scmp.ne.s32.totalorder %s83, %s84
      %p98 = scmp.eq.s32.totalorder %s20, 1
      %p99 = por %p97, %p98
      %p101 = scmp.ne.s32.totalorder %s84, %s100
      %p102 = scmp.eq.s32.totalorder %s20, 0
      %p103 = por %p101, %p102
      %s104 = ssub.s32 %s21, %s33
      %s105 = ssub.s32 %s22, %s29
      %s106 = sor.u32 %s104, %s105
      %p107 = scmp.eq.s32.totalorder %s106, 0
      %s109 = sadd.s32 %s108, 1
      %s110 = scalar_select %p107, %s108, %s109
      %p113 = pneg %p107
      %p114 = scmp.eq.s32.totalorder %s14, 1
      %p115 = por %p113, %p114
      %p116 = scmp.ne.s32.totalorder %s108, %s111
      %p117 = scmp.eq.s32.totalorder %s14, 0
      %p118 = por %p116, %p117
      %p119 = scmp.ne.s32.totalorder %s108, %s111
      %p120 = scmp.eq.s32.totalorder %s19, 1
      %p121 = por %p119, %p120
      %p122 = scmp.ne.s32.totalorder %s111, %s112
      %p123 = scmp.eq.s32.totalorder %s19, 0
      %p124 = por %p122, %p123
      %p125 = scmp.ne.s32.totalorder %s111, %s112
      %p126 = scmp.eq.s32.totalorder %s20, 1
      %p127 = por %p125, %p126
      %p129 = scmp.ne.s32.totalorder %s112, %s128
      %p130 = scmp.eq.s32.totalorder %s20, 0
      %p131 = por %p129, %p130
      %p132 = scmp.le.s32.totalorder 1, %s14
      %p133 = scmp.lt.s32.totalorder %s14, 3
      %p134 = pnand %p132, %p133
      %p135 = pneg %p134
      // Predicated region
      $region9: #{tpu_custom_call.1} parent=5 // pred_check
        _
      $region10: #{tpu_custom_call.1} parent=5 // pred_check_branch
        %137 = sbr.rel (%p134) target = $region12
      $region11: #{tpu_custom_call.1} parent=5 // pred_region
        %s138 = ssub.s32 %s14, 1
        // Predicated region
        $region13: #{tpu_custom_call.1} parent=11 // pred_check
          %p139 = pneg %p47
        $region14: #{tpu_custom_call.1} parent=11 // pred_check_branch
          %141 = sbr.rel (%p139) target = $region16
        $region15: #{tpu_custom_call.1} parent=11 // pred_region
          %s143 = ssub.s32 16, 16
          %144 = vsyncadd [#allocation4], %s143
          %147 = dma.hbm_to_smem %s0, 16, [#allocation2], [#allocation4]
        $region16: #{tpu_custom_call.1} parent=11 // pred_fallthru
          _
        // Predicated region
        $region17: #{tpu_custom_call.1} parent=11 // pred_check
          %p148 = pneg %p68
        $region18: #{tpu_custom_call.1} parent=11 // pred_check_branch
          %150 = sbr.rel (%p148) target = $region20
        $region19: #{tpu_custom_call.1} parent=11 // pred_region
          %s152 = ssub.s32 16, 16
          %153 = vsyncadd [#allocation5], %s152
          %s155 = sshll.u32 %s1, 4
          %s156 = int_to_ptr.vmem [resolvable:$true] %s155
          %158 = dma.vmem_to_smem %s156, 16, [#allocation6], [#allocation5]
        $region20: #{tpu_custom_call.1} parent=11 // pred_fallthru
          _
      $region12: #{tpu_custom_call.1} parent=5 // pred_fallthru
        _
      %p159 = scmp.lt.s32.totalorder %s14, 2
      // Predicated region
      $region21: #{tpu_custom_call.1} parent=5 // pred_check
        %p160 = pneg %p159
      $region22: #{tpu_custom_call.1} parent=5 // pred_check_branch
        %162 = sbr.rel (%p160) target = $region24
      $region23: #{tpu_custom_call.1} parent=5 // pred_region
        // Predicated region
        $region25: #{tpu_custom_call.1} parent=23 // pred_check
          %p163 = pneg %p90
        $region26: #{tpu_custom_call.1} parent=23 // pred_check_branch
          %165 = sbr.rel (%p163) target = $region28
        $region27: #{tpu_custom_call.1} parent=23 // pred_region
          %s166 = sand.u32 %s80, 1
          %s167 = scalar_lea.sflag [#allocation3], %s166
          %s168 = sand.u32 %s80, 1
          %s169 = smul.addr %s168, 64
          %s170 = scalar_lea.vmem [#allocation7], %s169
          %s171 = smul.u32 2, %s22
          %s173 = ssub.s32 1024, 1024
          %174 = vsyncadd %s167, %s173
          %s175 = smul.addr %s21, 8
          %s176 = sadd.s32 %s171, %s175
          %s177 = smul.addr %s176, 128
          %s178 = scalar_lea.hbm %s2, %s177
          %s179 = sshll.u32 %s170, 4
          %s180 = int_to_ptr.vmem [resolvable:$true] %s179
          %185 = dma.hbm_to_vmem [thread:$0]  %s178, 1024, %s180, %s167, 256, 256, 16
        $region28: #{tpu_custom_call.1} parent=23 // pred_fallthru
          _
      $region24: #{tpu_custom_call.1} parent=5 // pred_fallthru
        _
      %p186 = scmp.le.s32.totalorder 1, %s14
      %p187 = scmp.lt.s32.totalorder %s14, 3
      %p188 = pnand %p186, %p187
      %p189 = pneg %p188
      // Predicated region
      $region29: #{tpu_custom_call.1} parent=5 // pred_check
        _
      $region30: #{tpu_custom_call.1} parent=5 // pred_check_branch
        %191 = sbr.rel (%p188) target = $region32
      $region31: #{tpu_custom_call.1} parent=5 // pred_region
        %s192 = ssub.s32 %s14, 1
        // Predicated region
        $region33: #{tpu_custom_call.1} parent=31 // pred_check
          %p193 = pneg %p47
        $region34: #{tpu_custom_call.1} parent=31 // pred_check_branch
          %195 = sbr.rel (%p193) target = $region36
        $region35: #{tpu_custom_call.1} parent=31 // pred_region
          %196 = dma.done [#allocation4], 16
        $region36: #{tpu_custom_call.1} parent=31 // pred_fallthru
          _
        // Predicated region
        $region37: #{tpu_custom_call.1} parent=31 // pred_check
          %p197 = pneg %p68
        $region38: #{tpu_custom_call.1} parent=31 // pred_check_branch
          %199 = sbr.rel (%p197) target = $region40
        $region39: #{tpu_custom_call.1} parent=31 // pred_region
          %200 = dma.done [#allocation5], 16
        $region40: #{tpu_custom_call.1} parent=31 // pred_fallthru
          _
        %s201 = sand.u32 %s83, 1
        %s202 = scalar_lea.sflag [#allocation3], %s201
        %s203 = sand.u32 %s83, 1
        %s204 = smul.addr %s203, 64
        %s205 = scalar_lea.vmem [#allocation7], %s204
        // Predicated region
        $region41: #{tpu_custom_call.1} parent=31 // pred_check
          %p206 = pneg %p96
        $region42: #{tpu_custom_call.1} parent=31 // pred_check_branch
          %208 = sbr.rel (%p206) target = $region44
        $region43: #{tpu_custom_call.1} parent=31 // pred_region
          %209 = dma.done %s202, 1024
        $region44: #{tpu_custom_call.1} parent=31 // pred_fallthru
          _
        %210 = sfence
        %p211 = pneg %p47
        %p212 = pneg %p44
        %p213 = pneg %p68
        %p214 = pneg %p65
        %s215 = sand.u32 %s83, 1
        %s216 = scalar_lea.sflag [#allocation3], %s215
        %s217 = sand.u32 %s83, 1
        %s218 = smul.addr %s217, 64
        %s219 = scalar_lea.vmem [#allocation7], %s218
        %p220 = pneg %p96
        %p221 = pneg %p93
        %p222 = pneg %p124
        %p223 = pneg %p121
        %s224 = smul.u32 2, %s24
        %p225 = scmp.lt.s32.totalorder %s23, 1
        %s226 = scalar_select %p225, %s23, 1
        %p227 = scmp.lt.s32.totalorder %s224, 1
        %s228 = scalar_select %p227, %s224, 1
        %s229 = smul.addr %s226, 16
        %s230 = sadd.s32 %s228, %s229
        %s231 = smul.addr %s230, 8
        %s232 = scalar_lea.vmem %s3, %s231
        %s233 = smul.u32 2, %s24
        %s234 = smul.u32 2, %s24
        %p235 = scmp.lt.s32.totalorder %s23, 1
        %s236 = scalar_select %p235, %s23, 1
        %p237 = scmp.lt.s32.totalorder %s234, 1
        %s238 = scalar_select %p237, %s234, 1
        %s239 = smul.addr %s236, 16
        %s240 = sadd.s32 %s238, %s239
        %s241 = smul.addr %s240, 8
        %s242 = scalar_lea.vmem %s3, %s241
        %s243 = smul.u32 2, %s24
        %s244 = sld [smem:[#allocation6]]
        %s245 = sld [smem:[#allocation2]]
        %v246 = vld [vmem:[%s205] sm:$0xff]
        %v247 = vld [vmem:[%s205 + $0x8] sm:$0xff]
        %v248 = vstv %s245
        %v249 = vmul.f32 %v248, %v246
        %v250 = vmul.f32 %v248, %v247
        %s251 = sld [smem:[#allocation2 + $0x8]]
        %s252 = scalar_lea.vmem %s205, 16 [#allocation7]
        %v253 = vld [vmem:[%s252] sm:$0xff]
        %v254 = vld [vmem:[%s252 + $0x8] sm:$0xff]
        %v255 = vstv %s251
        %v256 = vmul.f32 %v255, %v253
        %v257 = vmul.f32 %v255, %v254
        %v258 = vadd.f32 %v249, %v256
        %v259 = vadd.f32 %v250, %v257
        %s260 = sld [smem:[#allocation2 + $0x10]]
        %s261 = scalar_lea.vmem %s205, 32 [#allocation7]
        %v262 = vld [vmem:[%s261] sm:$0xff]
        %v263 = vld [vmem:[%s261 + $0x8] sm:$0xff]
        %v264 = vstv %s260
        %v265 = vmul.f32 %v264, %v262
        %v266 = vmul.f32 %v264, %v263
        %v267 = vadd.f32 %v258, %v265
        %v268 = vadd.f32 %v259, %v266
        %s269 = sld [smem:[#allocation2 + $0x18]]
        %s270 = scalar_lea.vmem %s205, 48 [#allocation7]
        %v271 = vld [vmem:[%s270] sm:$0xff]
        %v272 = vld [vmem:[%s270 + $0x8] sm:$0xff]
        %v273 = vstv %s269
        %v274 = vmul.f32 %v273, %v271
        %v275 = vmul.f32 %v273, %v272
        %v276 = vadd.f32 %v267, %v274
        %v277 = vadd.f32 %v268, %v275
        %v278 = vstv %s244
        %v279 = vadd.f32 %v276, %v278
        %v280 = vadd.f32 %v277, %v278
        %281 = vst [vmem:[%s242] sm:$0xff] %v279
        %282 = vst [vmem:[%s242 + $0x8] sm:$0xff] %v280
        %s283 = sld [smem:[#allocation2 + $0x1]]
        %v284 = vld [vmem:[%s205] sm:$0xff]
        %v285 = vld [vmem:[%s205 + $0x8] sm:$0xff]
        %v286 = vstv %s283
        %v287 = vmul.f32 %v286, %v284
        %v288 = vmul.f32 %v286, %v285
        %s289 = sld [smem:[#allocation2 + $0x9]]
        %v290 = vld [vmem:[%s252] sm:$0xff]
        %v291 = vld [vmem:[%s252 + $0x8] sm:$0xff]
        %v292 = vstv %s289
        %v293 = vmul.f32 %v292, %v290
        %v294 = vmul.f32 %v292, %v291
        %v295 = vadd.f32 %v287, %v293
        %v296 = vadd.f32 %v288, %v294
        %s297 = sld [smem:[#allocation2 + $0x11]]
        %v298 = vld [vmem:[%s261] sm:$0xff]
        %v299 = vld [vmem:[%s261 + $0x8] sm:$0xff]
        %v300 = vstv %s297
        %v301 = vmul.f32 %v300, %v298
        %v302 = vmul.f32 %v300, %v299
        %v303 = vadd.f32 %v295, %v301
        %v304 = vadd.f32 %v296, %v302
        %s305 = sld [smem:[#allocation2 + $0x19]]
        %v306 = vld [vmem:[%s270] sm:$0xff]
        %v307 = vld [vmem:[%s270 + $0x8] sm:$0xff]
        %v308 = vstv %s305
        %v309 = vmul.f32 %v308, %v306
        %v310 = vmul.f32 %v308, %v307
        %v311 = vadd.f32 %v303, %v309
        %v312 = vadd.f32 %v304, %v310
        %v313 = vadd.f32 %v311, %v278
        %v314 = vadd.f32 %v312, %v278
        %v317 = vcombine.high %v313, %v314
        %v319 = vunpack.c.l.s4 1966171168
        %v320 = vunpack.c.0.s8 %v319
        %v321 = vlaneseq
        %v322 = vshrl.u32 %v321, 7
        %v323 = vsub.s32 %v320, %v322
        %v324 = vrot.slane %v317, %v323
        %v325 = vcombine.high %v324, %v324
        %v327 = vunpack.c.l.s4 1966171168
        %v328 = vunpack.c.0.s8 %v327
        %v329 = vlaneseq
        %v330 = vshrl.u32 %v329, 7
        %v331 = vsub.s32 %v328, %v330
        %v332 = vrot.slane %v325, %v331
        %v333 = vcombine.high %v332, %v332
        %v335 = vlaneseq
        %vm336 = vcmp.ge.s32.totalorder %v335, 0
        %vm337 = vcmp.lt.s32.totalorder %v335, 256
        %vm338 = vmand %vm336, %vm337
        %s339 = scalar_lea.vmem %s242, 16
        %340 = vst.msk [vmem:[%s339] ss:$8 sm:$0x3] %vm338, %v333
        %341 = vst.msk [vmem:[%s339] ss:$8 sm:$0x0] %vm338, %v333
        %v342 = vld [vmem:[%s242] sm:$0xfe]
        %v343 = vld [vmem:[%s242 + $0x8] sm:$0xfe]
        %v346 = vrot.slane %v311, 7
        %v347 = vrot.slane %v312, 7
        %v350 = vadd.f32 %v342, %v346
        %v351 = vadd.f32 %v343, %v347
        %352 = vst [vmem:[%s242] sm:$0xfe] %v350
        %353 = vst [vmem:[%s242 + $0x8] sm:$0xfe] %v351
        %s354 = sld [smem:[#allocation6 + $0x1]]
        %s355 = sld [smem:[#allocation2 + $0x2]]
        %v356 = vld [vmem:[%s205] sm:$0xff]
        %v357 = vld [vmem:[%s205 + $0x8] sm:$0xff]
        %v358 = vstv %s355
        %v359 = vmul.f32 %v358, %v356
        %v360 = vmul.f32 %v358, %v357
        %s361 = sld [smem:[#allocation2 + $0xa]]
        %v362 = vld [vmem:[%s252] sm:$0xff]
        %v363 = vld [vmem:[%s252 + $0x8] sm:$0xff]
        %v364 = vstv %s361
        %v365 = vmul.f32 %v364, %v362
        %v366 = vmul.f32 %v364, %v363
        %v367 = vadd.f32 %v359, %v365
        %v368 = vadd.f32 %v360, %v366
        %s369 = sld [smem:[#allocation2 + $0x12]]
        %v370 = vld [vmem:[%s261] sm:$0xff]
        %v371 = vld [vmem:[%s261 + $0x8] sm:$0xff]
        %v372 = vstv %s369
        %v373 = vmul.f32 %v372, %v370
        %v374 = vmul.f32 %v372, %v371
        %v375 = vadd.f32 %v367, %v373
        %v376 = vadd.f32 %v368, %v374
        %s377 = sld [smem:[#allocation2 + $0x1a]]
        %v378 = vld [vmem:[%s270] sm:$0xff]
        %v379 = vld [vmem:[%s270 + $0x8] sm:$0xff]
        %v380 = vstv %s377
        %v381 = vmul.f32 %v380, %v378
        %v382 = vmul.f32 %v380, %v379
        %v383 = vadd.f32 %v375, %v381
        %v384 = vadd.f32 %v376, %v382
        %v385 = vstv %s354
        %v386 = vadd.f32 %v383, %v385
        %v387 = vadd.f32 %v384, %v385
        %s388 = scalar_lea.vmem %s242, 32
        %389 = vst [vmem:[%s388] sm:$0xff] %v386
        %390 = vst [vmem:[%s388 + $0x8] sm:$0xff] %v387
        %s391 = sld [smem:[#allocation2 + $0x3]]
        %v392 = vld [vmem:[%s205] sm:$0xff]
        %v393 = vld [vmem:[%s205 + $0x8] sm:$0xff]
        %v394 = vstv %s391
        %v395 = vmul.f32 %v394, %v392
        %v396 = vmul.f32 %v394, %v393
        %s397 = sld [smem:[#allocation2 + $0xb]]
        %v398 = vld [vmem:[%s252] sm:$0xff]
        %v399 = vld [vmem:[%s252 + $0x8] sm:$0xff]
        %v400 = vstv %s397
        %v401 = vmul.f32 %v400, %v398
        %v402 = vmul.f32 %v400, %v399
        %v403 = vadd.f32 %v395, %v401
        %v404 = vadd.f32 %v396, %v402
        %s405 = sld [smem:[#allocation2 + $0x13]]
        %v406 = vld [vmem:[%s261] sm:$0xff]
        %v407 = vld [vmem:[%s261 + $0x8] sm:$0xff]
        %v408 = vstv %s405
        %v409 = vmul.f32 %v408, %v406
        %v410 = vmul.f32 %v408, %v407
        %v411 = vadd.f32 %v403, %v409
        %v412 = vadd.f32 %v404, %v410
        %s413 = sld [smem:[#allocation2 + $0x1b]]
        %v414 = vld [vmem:[%s270] sm:$0xff]
        %v415 = vld [vmem:[%s270 + $0x8] sm:$0xff]
        %v416 = vstv %s413
        %v417 = vmul.f32 %v416, %v414
        %v418 = vmul.f32 %v416, %v415
        %v419 = vadd.f32 %v411, %v417
        %v420 = vadd.f32 %v412, %v418
        %v421 = vadd.f32 %v419, %v385
        %v422 = vadd.f32 %v420, %v385
        %v425 = vcombine.high %v421, %v422
        %v427 = vunpack.c.l.s4 1966171168
        %v428 = vunpack.c.0.s8 %v427
        %v429 = vlaneseq
        %v430 = vshrl.u32 %v429, 7
        %v431 = vsub.s32 %v428, %v430
        %v432 = vrot.slane %v425, %v431
        %v433 = vcombine.high %v432, %v432
        %v435 = vunpack.c.l.s4 1966171168
        %v436 = vunpack.c.0.s8 %v435
        %v437 = vlaneseq
        %v438 = vshrl.u32 %v437, 7
        %v439 = vsub.s32 %v436, %v438
        %v440 = vrot.slane %v433, %v439
        %v441 = vcombine.high %v440, %v440
        %s443 = scalar_lea.vmem %s388, 16
        %444 = vst.msk [vmem:[%s443] ss:$8 sm:$0x3] %vm338, %v441
        %445 = vst.msk [vmem:[%s443] ss:$8 sm:$0x0] %vm338, %v441
        %v446 = vld [vmem:[%s388] sm:$0xfe]
        %v447 = vld [vmem:[%s388 + $0x8] sm:$0xfe]
        %v450 = vrot.slane %v419, 7
        %v451 = vrot.slane %v420, 7
        %v454 = vadd.f32 %v446, %v450
        %v455 = vadd.f32 %v447, %v451
        %456 = vst [vmem:[%s388] sm:$0xfe] %v454
        %457 = vst [vmem:[%s388 + $0x8] sm:$0xfe] %v455
        %s458 = sld [smem:[#allocation6 + $0x2]]
        %s459 = sld [smem:[#allocation2 + $0x4]]
        %v460 = vld [vmem:[%s205] sm:$0xff]
        %v461 = vld [vmem:[%s205 + $0x8] sm:$0xff]
        %v462 = vstv %s459
        %v463 = vmul.f32 %v462, %v460
        %v464 = vmul.f32 %v462, %v461
        %s465 = sld [smem:[#allocation2 + $0xc]]
        %v466 = vld [vmem:[%s252] sm:$0xff]
        %v467 = vld [vmem:[%s252 + $0x8] sm:$0xff]
        %v468 = vstv %s465
        %v469 = vmul.f32 %v468, %v466
        %v470 = vmul.f32 %v468, %v467
        %v471 = vadd.f32 %v463, %v469
        %v472 = vadd.f32 %v464, %v470
        %s473 = sld [smem:[#allocation2 + $0x14]]
        %v474 = vld [vmem:[%s261] sm:$0xff]
        %v475 = vld [vmem:[%s261 + $0x8] sm:$0xff]
        %v476 = vstv %s473
        %v477 = vmul.f32 %v476, %v474
        %v478 = vmul.f32 %v476, %v475
        %v479 = vadd.f32 %v471, %v477
        %v480 = vadd.f32 %v472, %v478
        %s481 = sld [smem:[#allocation2 + $0x1c]]
        %v482 = vld [vmem:[%s270] sm:$0xff]
        %v483 = vld [vmem:[%s270 + $0x8] sm:$0xff]
        %v484 = vstv %s481
        %v485 = vmul.f32 %v484, %v482
        %v486 = vmul.f32 %v484, %v483
        %v487 = vadd.f32 %v479, %v485
        %v488 = vadd.f32 %v480, %v486
        %v489 = vstv %s458
        %v490 = vadd.f32 %v487, %v489
        %v491 = vadd.f32 %v488, %v489
        %s492 = scalar_lea.vmem %s242, 64
        %493 = vst [vmem:[%s492] sm:$0xff] %v490
        %494 = vst [vmem:[%s492 + $0x8] sm:$0xff] %v491
        %s495 = sld [smem:[#allocation2 + $0x5]]
        %v496 = vld [vmem:[%s205] sm:$0xff]
        %v497 = vld [vmem:[%s205 + $0x8] sm:$0xff]
        %v498 = vstv %s495
        %v499 = vmul.f32 %v498, %v496
        %v500 = vmul.f32 %v498, %v497
        %s501 = sld [smem:[#allocation2 + $0xd]]
        %v502 = vld [vmem:[%s252] sm:$0xff]
        %v503 = vld [vmem:[%s252 + $0x8] sm:$0xff]
        %v504 = vstv %s501
        %v505 = vmul.f32 %v504, %v502
        %v506 = vmul.f32 %v504, %v503
        %v507 = vadd.f32 %v499, %v505
        %v508 = vadd.f32 %v500, %v506
        %s509 = sld [smem:[#allocation2 + $0x15]]
        %v510 = vld [vmem:[%s261] sm:$0xff]
        %v511 = vld [vmem:[%s261 + $0x8] sm:$0xff]
        %v512 = vstv %s509
        %v513 = vmul.f32 %v512, %v510
        %v514 = vmul.f32 %v512, %v511
        %v515 = vadd.f32 %v507, %v513
        %v516 = vadd.f32 %v508, %v514
        %s517 = sld [smem:[#allocation2 + $0x1d]]
        %v518 = vld [vmem:[%s270] sm:$0xff]
        %v519 = vld [vmem:[%s270 + $0x8] sm:$0xff]
        %v520 = vstv %s517
        %v521 = vmul.f32 %v520, %v518
        %v522 = vmul.f32 %v520, %v519
        %v523 = vadd.f32 %v515, %v521
        %v524 = vadd.f32 %v516, %v522
        %v525 = vadd.f32 %v523, %v489
        %v526 = vadd.f32 %v524, %v489
        %v529 = vcombine.high %v525, %v526
        %v531 = vunpack.c.l.s4 1966171168
        %v532 = vunpack.c.0.s8 %v531
        %v533 = vlaneseq
        %v534 = vshrl.u32 %v533, 7
        %v535 = vsub.s32 %v532, %v534
        %v536 = vrot.slane %v529, %v535
        %v537 = vcombine.high %v536, %v536
        %v539 = vunpack.c.l.s4 1966171168
        %v540 = vunpack.c.0.s8 %v539
        %v541 = vlaneseq
        %v542 = vshrl.u32 %v541, 7
        %v543 = vsub.s32 %v540, %v542
        %v544 = vrot.slane %v537, %v543
        %v545 = vcombine.high %v544, %v544
        %s547 = scalar_lea.vmem %s492, 16
        %548 = vst.msk [vmem:[%s547] ss:$8 sm:$0x3] %vm338, %v545
        %549 = vst.msk [vmem:[%s547] ss:$8 sm:$0x0] %vm338, %v545
        %v550 = vld [vmem:[%s492] sm:$0xfe]
        %v551 = vld [vmem:[%s492 + $0x8] sm:$0xfe]
        %v554 = vrot.slane %v523, 7
        %v555 = vrot.slane %v524, 7
        %v558 = vadd.f32 %v550, %v554
        %v559 = vadd.f32 %v551, %v555
        %560 = vst [vmem:[%s492] sm:$0xfe] %v558
        %561 = vst [vmem:[%s492 + $0x8] sm:$0xfe] %v559
        %s562 = sld [smem:[#allocation6 + $0x3]]
        %s563 = sld [smem:[#allocation2 + $0x6]]
        %v564 = vld [vmem:[%s205] sm:$0xff]
        %v565 = vld [vmem:[%s205 + $0x8] sm:$0xff]
        %v566 = vstv %s563
        %v567 = vmul.f32 %v566, %v564
        %v568 = vmul.f32 %v566, %v565
        %s569 = sld [smem:[#allocation2 + $0xe]]
        %v570 = vld [vmem:[%s252] sm:$0xff]
        %v571 = vld [vmem:[%s252 + $0x8] sm:$0xff]
        %v572 = vstv %s569
        %v573 = vmul.f32 %v572, %v570
        %v574 = vmul.f32 %v572, %v571
        %v575 = vadd.f32 %v567, %v573
        %v576 = vadd.f32 %v568, %v574
        %s577 = sld [smem:[#allocation2 + $0x16]]
        %v578 = vld [vmem:[%s261] sm:$0xff]
        %v579 = vld [vmem:[%s261 + $0x8] sm:$0xff]
        %v580 = vstv %s577
        %v581 = vmul.f32 %v580, %v578
        %v582 = vmul.f32 %v580, %v579
        %v583 = vadd.f32 %v575, %v581
        %v584 = vadd.f32 %v576, %v582
        %s585 = sld [smem:[#allocation2 + $0x1e]]
        %v586 = vld [vmem:[%s270] sm:$0xff]
        %v587 = vld [vmem:[%s270 + $0x8] sm:$0xff]
        %v588 = vstv %s585
        %v589 = vmul.f32 %v588, %v586
        %v590 = vmul.f32 %v588, %v587
        %v591 = vadd.f32 %v583, %v589
        %v592 = vadd.f32 %v584, %v590
        %v593 = vstv %s562
        %v594 = vadd.f32 %v591, %v593
        %v595 = vadd.f32 %v592, %v593
        %s596 = scalar_lea.vmem %s242, 96
        %597 = vst [vmem:[%s596] sm:$0xff] %v594
        %598 = vst [vmem:[%s596 + $0x8] sm:$0xff] %v595
        %s599 = sld [smem:[#allocation2 + $0x7]]
        %v600 = vld [vmem:[%s205] sm:$0xff]
        %v601 = vld [vmem:[%s205 + $0x8] sm:$0xff]
        %v602 = vstv %s599
        %v603 = vmul.f32 %v602, %v600
        %v604 = vmul.f32 %v602, %v601
        %s605 = sld [smem:[#allocation2 + $0xf]]
        %v606 = vld [vmem:[%s252] sm:$0xff]
        %v607 = vld [vmem:[%s252 + $0x8] sm:$0xff]
        %v608 = vstv %s605
        %v609 = vmul.f32 %v608, %v606
        %v610 = vmul.f32 %v608, %v607
        %v611 = vadd.f32 %v603, %v609
        %v612 = vadd.f32 %v604, %v610
        %s613 = sld [smem:[#allocation2 + $0x17]]
        %v614 = vld [vmem:[%s261] sm:$0xff]
        %v615 = vld [vmem:[%s261 + $0x8] sm:$0xff]
        %v616 = vstv %s613
        %v617 = vmul.f32 %v616, %v614
        %v618 = vmul.f32 %v616, %v615
        %v619 = vadd.f32 %v611, %v617
        %v620 = vadd.f32 %v612, %v618
        %s621 = sld [smem:[#allocation2 + $0x1f]]
        %v622 = vld [vmem:[%s270] sm:$0xff]
        %v623 = vld [vmem:[%s270 + $0x8] sm:$0xff]
        %v624 = vstv %s621
        %v625 = vmul.f32 %v624, %v622
        %v626 = vmul.f32 %v624, %v623
        %v627 = vadd.f32 %v619, %v625
        %v628 = vadd.f32 %v620, %v626
        %v629 = vadd.f32 %v627, %v593
        %v630 = vadd.f32 %v628, %v593
        %v633 = vcombine.high %v629, %v630
        %v635 = vunpack.c.l.s4 1966171168
        %v636 = vunpack.c.0.s8 %v635
        %v637 = vlaneseq
        %v638 = vshrl.u32 %v637, 7
        %v639 = vsub.s32 %v636, %v638
        %v640 = vrot.slane %v633, %v639
        %v641 = vcombine.high %v640, %v640
        %v643 = vunpack.c.l.s4 1966171168
        %v644 = vunpack.c.0.s8 %v643
        %v645 = vlaneseq
        %v646 = vshrl.u32 %v645, 7
        %v647 = vsub.s32 %v644, %v646
        %v648 = vrot.slane %v641, %v647
        %v649 = vcombine.high %v648, %v648
        %s651 = scalar_lea.vmem %s596, 16
        %652 = vst.msk [vmem:[%s651] ss:$8 sm:$0x3] %vm338, %v649
        %653 = vst.msk [vmem:[%s651] ss:$8 sm:$0x0] %vm338, %v649
        %v654 = vld [vmem:[%s596] sm:$0xfe]
        %v655 = vld [vmem:[%s596 + $0x8] sm:$0xfe]
        %v658 = vrot.slane %v627, 7
        %v659 = vrot.slane %v628, 7
        %v662 = vadd.f32 %v654, %v658
        %v663 = vadd.f32 %v655, %v659
        %664 = vst [vmem:[%s596] sm:$0xfe] %v662
        %665 = vst [vmem:[%s596 + $0x8] sm:$0xfe] %v663
        %s666 = smul.u32 2, %s24
        %p667 = scmp.lt.s32.totalorder %s23, 1
        %s668 = scalar_select %p667, %s23, 1
        %p669 = scmp.lt.s32.totalorder %s666, 1
        %s670 = scalar_select %p669, %s666, 1
        %s671 = smul.addr %s668, 16
        %s672 = sadd.s32 %s670, %s671
        %s673 = smul.addr %s672, 8
        %s674 = scalar_lea.vmem %s3, %s673
        // Predicated region
        $region45: #{tpu_custom_call.1} parent=31 // pred_check
          %p675 = pneg %p121
        $region46: #{tpu_custom_call.1} parent=31 // pred_check_branch
          %677 = sbr.rel (%p675) target = $region48
        $region47: #{tpu_custom_call.1} parent=31 // pred_region
          %s678 = smul.u32 2, %s24
        $region48: #{tpu_custom_call.1} parent=31 // pred_fallthru
          _
      $region32: #{tpu_custom_call.1} parent=5 // pred_fallthru
        _
      %p679 = scmp.le.s32.totalorder 2, %s14
      // Predicated region
      $region49: #{tpu_custom_call.1} parent=5 // pred_check
        %p680 = pneg %p679
      $region50: #{tpu_custom_call.1} parent=5 // pred_check_branch
        %682 = sbr.rel (%p680) target = $region52
      $region51: #{tpu_custom_call.1} parent=5 // pred_region
        %s683 = ssub.s32 %s14, 2
        // Predicated region
        $region53: #{tpu_custom_call.1} parent=51 // pred_check
          %p684 = pneg %p127
        $region54: #{tpu_custom_call.1} parent=51 // pred_check_branch
          %686 = sbr.rel (%p684) target = $region56
        $region55: #{tpu_custom_call.1} parent=51 // pred_region
          %s687 = smul.u32 2, %s26
          %p688 = scmp.lt.s32.totalorder %s25, 1
          %s689 = scalar_select %p688, %s25, 1
          %p690 = scmp.lt.s32.totalorder %s687, 1
          %s691 = scalar_select %p690, %s687, 1
          %s692 = smul.addr %s689, 16
          %s693 = sadd.s32 %s691, %s692
          %s694 = smul.addr %s693, 8
          %s695 = scalar_lea.vmem %s3, %s694
        $region56: #{tpu_custom_call.1} parent=51 // pred_fallthru
          _
      $region52: #{tpu_custom_call.1} parent=5 // pred_fallthru
        _
    $region6: #{tpu_custom_call.1} parent=1 // loop_footer
      %s18 = sadd.s32 1, %s14
    $region7: #{tpu_custom_call.1} parent=1 // loop_footer_branch
      %13 = sbr.rel target = $region3
    $region8: #{tpu_custom_call.1} parent=1 // loop_exit
      _
    %696 = vsyncpa [#allocation3], 1
    %s697 = scalar_lea.sflag [#allocation3], 1
    %698 = vsyncpa %s697, 1
    %699 = vsyncpa [#allocation4], 1
    %s700 = scalar_lea.sflag [#allocation4], 1
    %701 = vsyncpa %s700, 1
    %702 = vsyncpa [#allocation5], 1
    %s703 = scalar_lea.sflag [#allocation5], 1
    %704 = vsyncpa %s703, 1

</llo_original>
